<compile_context>
chip_gen: v7x
topology: tpu7x:2x2x1
jax: 0.10.0
libtpu: 0.0.40
codegen_flags: <defaults>
</compile_context>

<pallas_src>
import jax
import jax.numpy as jnp
from jax.experimental import pallas as pl
from jax.experimental.pallas import tpu as pltpu


def _round_up(x, m):
    return (x + m - 1) // m * m


def _softplus(x):
    # torch.nn.Softplus(beta=1, threshold=20): x > 20 -> x, else log1p(exp(x)).
    # (exp overflow in the discarded branch is harmless: where() drops it.)
    return jnp.where(x > 20.0, x, jnp.log1p(jnp.exp(x)))


def _make_kernel(n_obs, p_dim, lane_chunk, num_chunks):
    f32 = jnp.float32

    def kernel(design_ref, y_ref, lp_ref,
               w1_sq_ref, w1_as_ref, w1_ds_ref, w1_lpb_ref, w2_ref, o_ref):
        # Small weight blocks, loaded once per grid step (hoisted out of loops).
        w1_sq = w1_sq_ref[...]            # [D, P]  multiplies `squares`
        w1_as = w1_as_ref[...]            # [D, P]  multiplies `allsquare`
        w1_ds = w1_ds_ref[...]            # [D, P]  multiplies `design_suff`
        w1_lp = w1_lpb_ref[:, 0:1]        # [D, 1]  log_prob column of W1
        b1 = w1_lpb_ref[:, 1:2]           # [D, 1]
        w2 = w2_ref[...]                  # [1, D]

        # Static lane-chunk loop: offsets are compile-time constants (aligned
        # addressing, no dynamic lane-slice lowering), and the chunk size keeps
        # the three accumulators plus one design slice in vregs.
        for c in range(num_chunks):
            lanes = pl.ds(c * lane_chunk, lane_chunk)

            if n_obs <= 32:
                # Fused single pass over design: one load of design[n] feeds all
                # three sufficient statistics.  n_obs is static and small.
                suff = jnp.zeros((p_dim, lane_chunk), f32)
                squares = jnp.zeros((p_dim, lane_chunk), f32)
                dsum = jnp.zeros((p_dim, lane_chunk), f32)
                for n in range(n_obs):
                    d_n = design_ref[n, :, lanes].astype(f32)    # [P, LC]
                    y_n = y_ref[pl.ds(n, 1), lanes].astype(f32)  # [1, LC]
                    yd = y_n * d_n
                    suff = suff + yd
                    squares = squares + y_n * yd
                    dsum = dsum + d_n
            else:
                # Large-N fallback: vectorized reductions over the chunk.
                d = design_ref[:, :, lanes].astype(f32)          # [N, P, LC]
                yb = y_ref[:, lanes].astype(f32)[:, None, :]     # [N, 1, LC]
                suff = jnp.sum(yb * d, axis=0)
                squares = jnp.sum((yb * yb) * d, axis=0)
                dsum = jnp.sum(d, axis=0)

            allsquare = suff * suff                              # [P, LC]
            lp_c = lp_ref[:, lanes]                              # [1, LC]

            # linear1 without materializing m = cat([squares, allsquare,
            # design_suff, lp]):  W1 @ m == W1[:, :P] @ squares + ... .
            pre = (jnp.dot(w1_sq, squares, preferred_element_type=f32)
                   + jnp.dot(w1_as, allsquare, preferred_element_type=f32)
                   + jnp.dot(w1_ds, dsum, preferred_element_type=f32)
                   + w1_lp * lp_c                                # [D,1]*[1,LC]
                   + b1)                                         # [D,1] bcast
            h1 = _softplus(pre)                                  # [D, LC]

            # linear2 (b2 added by the wrapper): lane-dense [1, LC] store.
            o_ref[:, lanes] = jnp.dot(w2, h1, preferred_element_type=f32)

    return kernel


def t_neural_forward(design_t, y_t, lp, w1, b1, w2, b2, *, tb=None):
    """T_neural forward pass on TPU.

    design_t: [N, P, B] (batch-last), y_t: [N, B], lp: [B].
    w1: [D, D], b1: [D], w2: [1, D], b2: [1]  with D = 3*P + 1
    (PyTorch nn.Linear layout: out = x @ W.T + b).

    design_t / y_t may be float32 or bfloat16 (bf16 halves HBM traffic; the
    kernel accumulates in float32 either way).  Returns a [B] float32 array.
    """
    N, P, B = design_t.shape
    D = 3 * P + 1
    assert y_t.shape == (N, B) and lp.shape == (B,)
    assert w1.shape == (D, D) and b1.shape == (D,)
    assert w2.shape == (1, D) and b2.shape == (1,)

    f32 = jnp.float32

    # ---- batch tile size, derived from a conservative VMEM budget -----------
    # Per-lane bytes of one pipeline buffer (with (8,128) sublane padding):
    #   design N*ceil(P/8)*8  +  y ceil(N/8)*8  +  lp 8 (f32)  +  out 8 (f32).
    p_pad = _round_up(P, 8)
    n_pad = _round_up(N, 8)
    per_lane = (N * p_pad * jnp.dtype(design_t.dtype).itemsize
                + n_pad * jnp.dtype(y_t.dtype).itemsize
                + 8 * 4 + 8 * 4)
    # 12 MiB for the double-buffered streamed operands stays inside the tightest
    # per-generation budgets (v5e 16 MiB default scoped VMEM, v7x 64 MiB physical)
    # with room for weights + compiler scratch; vmem_limit below adds slack.
    budget = 12 << 20
    if tb is None:
        tb = budget // (2 * per_lane)
        tb = max(128, min(8192, (tb // 128) * 128))
        tb = min(tb, _round_up(B, 128))
        # Guarantee >= 2 grid steps when the batch allows it, so
        # dimension_semantics=("parallel",) can shard across v7x's two
        # TensorCores (costs only ~0.35us extra step overhead on 1-TC v5e/v6e).
        if B > 256:
            tb = min(tb, _round_up((B + 1) // 2, 128))
    tb = max(128, _round_up(tb, 128))
    num_tiles = pl.cdiv(B, tb)            # ragged last tile handled by Pallas

    # Lane-chunk size for the in-kernel loop (must divide tb).
    lane_chunk = 512 if tb % 512 == 0 else (256 if tb % 256 == 0 else 128)
    num_chunks = tb // lane_chunk

    # ---- one-time tiny weight packing (removes the in-kernel concat) --------
    w1 = w1.astype(f32)
    w1_sq = w1[:, 0:P]
    w1_as = w1[:, P:2 * P]
    w1_ds = w1[:, 2 * P:3 * P]
    w1_lpb = jnp.concatenate(
        [w1[:, 3 * P:3 * P + 1], b1.astype(f32).reshape(D, 1)], axis=1)  # [D,2]
    w2r = w2.astype(f32)
    lp2 = lp.astype(f32).reshape(1, B)

    kernel = _make_kernel(N, P, lane_chunk, num_chunks)

    out = pl.pallas_call(
        kernel,
        out_shape=jax.ShapeDtypeStruct((1, B), f32),
        grid=(num_tiles,),
        in_specs=[
            pl.BlockSpec((N, P, tb), lambda i: (0, 0, i)),   # design (batch-last)
            pl.BlockSpec((N, tb), lambda i: (0, i)),         # y
            pl.BlockSpec((1, tb), lambda i: (0, i)),         # lp
            pl.BlockSpec((D, P), lambda i: (0, 0)),          # W1[:, :P]
            pl.BlockSpec((D, P), lambda i: (0, 0)),          # W1[:, P:2P]
            pl.BlockSpec((D, P), lambda i: (0, 0)),          # W1[:, 2P:3P]
            pl.BlockSpec((D, 2), lambda i: (0, 0)),          # [W1[:, 3P] | b1]
            pl.BlockSpec((1, D), lambda i: (0, 0)),          # W2
        ],
        out_specs=pl.BlockSpec((1, tb), lambda i: (0, i)),   # lane-dense output
        compiler_params=pltpu.CompilerParams(
            dimension_semantics=("parallel",),
            vmem_limit_bytes=32 * 1024 * 1024),
    )(design_t, y_t, lp2, w1_sq, w1_as, w1_ds, w1_lpb, w2r)

    # linear2 bias (kept out of the kernel -> one fewer SMEM operand).
    return out[0] + b2.astype(f32)


def _reference(design_t, y_t, lp, w1, b1, w2, b2):
    design = jnp.transpose(design_t, (2, 0, 1)).astype(jnp.float32)  # [B, N, P]
    y = jnp.transpose(y_t, (1, 0)).astype(jnp.float32)               # [B, N]
    suff = jnp.einsum("bn,bnp->bp", y, design)
    squares = jnp.einsum("bn,bnp->bp", y * y, design)
    design_suff = design.sum(axis=1)
    m = jnp.concatenate([squares, suff ** 2, design_suff, lp[:, None]], axis=-1)
    h1 = jax.nn.softplus(m @ w1.T + b1)
    return (h1 @ w2.T + b2)[:, 0]


if __name__ == "__main__":
    # design_dim = y_dim = P = 4 -> input_dim D = 3P + 1 = 13 (the module
    # assumes y_dim == design_dim, as in its original usage).
    # B = 300 is small but non-multiple-of-128: it exercises the multi-tile grid
    # (megacore on v7x) and the ragged last batch tile (no padding pass).
    B, N, P = 300, 8, 4
    D = 3 * P + 1

    key = jax.random.PRNGKey(0)
    k_design, k_y, k_lp, k_w1, k_b1, k_w2, k_b2 = jax.random.split(key, 7)

    # Batch-last producer layout (see module docstring).
    design_t = jax.random.normal(k_design, (N, P, B), dtype=jnp.float32)
    y_t = jax.random.normal(k_y, (N, B), dtype=jnp.float32)
    lp = jax.random.normal(k_lp, (B,), dtype=jnp.float32)

    # PyTorch default nn.Linear init: U(-1/sqrt(fan_in), 1/sqrt(fan_in)).
    bound1 = 1.0 / jnp.sqrt(jnp.float32(D))
    w1 = jax.random.uniform(k_w1, (D, D), jnp.float32, -bound1, bound1)
    b1 = jax.random.uniform(k_b1, (D,), jnp.float32, -bound1, bound1)
    w2 = jax.random.uniform(k_w2, (1, D), jnp.float32, -bound1, bound1)
    b2 = jax.random.uniform(k_b2, (1,), jnp.float32, -bound1, bound1)

    out = jax.block_until_ready(
        t_neural_forward(design_t, y_t, lp, w1, b1, w2, b2))
    ref = _reference(design_t, y_t, lp, w1, b1, w2, b2)
    assert out.shape == (B,)
    assert jnp.allclose(out, ref, atol=1e-5, rtol=1e-5)
    print("KERNEL_OK")
</pallas_src>

<mosaic_0001>
module attributes {stable_mosaic.version = 11 : i64} {
  func.func @kernel(%arg0: i32, %arg1: memref<8x4x256xf32, #tpu.memory_space<vmem>>, %arg2: memref<8x256xf32, #tpu.memory_space<vmem>>, %arg3: memref<1x256xf32, #tpu.memory_space<vmem>>, %arg4: memref<13x4xf32, #tpu.memory_space<vmem>>, %arg5: memref<13x4xf32, #tpu.memory_space<vmem>>, %arg6: memref<13x4xf32, #tpu.memory_space<vmem>>, %arg7: memref<13x2xf32, #tpu.memory_space<vmem>>, %arg8: memref<1x13xf32, #tpu.memory_space<vmem>>, %arg9: memref<1x256xf32, #tpu.memory_space<vmem>>) attributes {dimension_semantics = [#tpu.dimension_semantics<parallel>], iteration_bounds = array<i64: 2>, scalar_prefetch = 0 : i64, scratch_operands = 0 : i64, tpu.core_type = #tpu.core_type<tc>, window_params = [{transform_indices = @transform_0, window_bounds = array<i64: 8, 4, 256>}, {transform_indices = @transform_1, window_bounds = array<i64: 8, 256>}, {transform_indices = @transform_2, window_bounds = array<i64: 1, 256>}, {pipeline_mode = #tpu.pipeline_mode<synchronous>, transform_indices = @transform_3, window_bounds = array<i64: 13, 4>}, {pipeline_mode = #tpu.pipeline_mode<synchronous>, transform_indices = @transform_4, window_bounds = array<i64: 13, 4>}, {pipeline_mode = #tpu.pipeline_mode<synchronous>, transform_indices = @transform_5, window_bounds = array<i64: 13, 4>}, {pipeline_mode = #tpu.pipeline_mode<synchronous>, transform_indices = @transform_6, window_bounds = array<i64: 13, 2>}, {pipeline_mode = #tpu.pipeline_mode<synchronous>, transform_indices = @transform_7, window_bounds = array<i64: 1, 13>}, {transform_indices = @transform_8, window_bounds = array<i64: 1, 256>}]} {
    %c0 = arith.constant 0 : index
    %c0_0 = arith.constant 0 : index
    %0 = vector.load %arg4[%c0, %c0_0] : memref<13x4xf32, #tpu.memory_space<vmem>>, vector<13x4xf32>
    %c0_1 = arith.constant 0 : index
    %c0_2 = arith.constant 0 : index
    %1 = vector.load %arg5[%c0_1, %c0_2] : memref<13x4xf32, #tpu.memory_space<vmem>>, vector<13x4xf32>
    %c0_3 = arith.constant 0 : index
    %c0_4 = arith.constant 0 : index
    %2 = vector.load %arg6[%c0_3, %c0_4] : memref<13x4xf32, #tpu.memory_space<vmem>>, vector<13x4xf32>
    %c0_5 = arith.constant 0 : index
    %c0_6 = arith.constant 0 : index
    %3 = vector.load %arg7[%c0_5, %c0_6] : memref<13x2xf32, #tpu.memory_space<vmem>>, vector<13x1xf32>
    %c0_7 = arith.constant 0 : index
    %c1 = arith.constant 1 : index
    %4 = vector.load %arg7[%c0_7, %c1] : memref<13x2xf32, #tpu.memory_space<vmem>>, vector<13x1xf32>
    %c0_8 = arith.constant 0 : index
    %c0_9 = arith.constant 0 : index
    %5 = vector.load %arg8[%c0_8, %c0_9] : memref<1x13xf32, #tpu.memory_space<vmem>>, vector<1x13xf32>
    %cst = arith.constant 0.000000e+00 : f32
    %6 = vector.broadcast %cst : f32 to vector<4x256xf32>
    %cst_10 = arith.constant 0.000000e+00 : f32
    %7 = vector.broadcast %cst_10 : f32 to vector<4x256xf32>
    %cst_11 = arith.constant 0.000000e+00 : f32
    %8 = vector.broadcast %cst_11 : f32 to vector<4x256xf32>
    %c0_12 = arith.constant 0 : index
    %c0_13 = arith.constant 0 : index
    %c0_14 = arith.constant 0 : index
    %9 = vector.load %arg1[%c0_12, %c0_13, %c0_14] : memref<8x4x256xf32, #tpu.memory_space<vmem>>, vector<1x4x256xf32>
    %10 = vector.shape_cast %9 : vector<1x4x256xf32> to vector<4x256xf32>
    %c0_15 = arith.constant 0 : index
    %c0_16 = arith.constant 0 : index
    %11 = vector.load %arg2[%c0_15, %c0_16] : memref<8x256xf32, #tpu.memory_space<vmem>>, vector<1x256xf32>
    %12 = vector.broadcast %11 : vector<1x256xf32> to vector<4x256xf32>
    %13 = arith.mulf %12, %10 : vector<4x256xf32>
    %14 = arith.addf %6, %13 : vector<4x256xf32>
    %15 = vector.broadcast %11 : vector<1x256xf32> to vector<4x256xf32>
    %16 = arith.mulf %15, %13 : vector<4x256xf32>
    %17 = arith.addf %7, %16 : vector<4x256xf32>
    %18 = arith.addf %8, %10 : vector<4x256xf32>
    %c1_17 = arith.constant 1 : index
    %c0_18 = arith.constant 0 : index
    %c0_19 = arith.constant 0 : index
    %19 = vector.load %arg1[%c1_17, %c0_18, %c0_19] : memref<8x4x256xf32, #tpu.memory_space<vmem>>, vector<1x4x256xf32>
    %20 = vector.shape_cast %19 : vector<1x4x256xf32> to vector<4x256xf32>
    %c1_20 = arith.constant 1 : index
    %c0_21 = arith.constant 0 : index
    %21 = vector.load %arg2[%c1_20, %c0_21] : memref<8x256xf32, #tpu.memory_space<vmem>>, vector<1x256xf32>
    %22 = vector.broadcast %21 : vector<1x256xf32> to vector<4x256xf32>
    %23 = arith.mulf %22, %20 : vector<4x256xf32>
    %24 = arith.addf %14, %23 : vector<4x256xf32>
    %25 = vector.broadcast %21 : vector<1x256xf32> to vector<4x256xf32>
    %26 = arith.mulf %25, %23 : vector<4x256xf32>
    %27 = arith.addf %17, %26 : vector<4x256xf32>
    %28 = arith.addf %18, %20 : vector<4x256xf32>
    %c2 = arith.constant 2 : index
    %c0_22 = arith.constant 0 : index
    %c0_23 = arith.constant 0 : index
    %29 = vector.load %arg1[%c2, %c0_22, %c0_23] : memref<8x4x256xf32, #tpu.memory_space<vmem>>, vector<1x4x256xf32>
    %30 = vector.shape_cast %29 : vector<1x4x256xf32> to vector<4x256xf32>
    %c2_24 = arith.constant 2 : index
    %c0_25 = arith.constant 0 : index
    %31 = vector.load %arg2[%c2_24, %c0_25] : memref<8x256xf32, #tpu.memory_space<vmem>>, vector<1x256xf32>
    %32 = vector.broadcast %31 : vector<1x256xf32> to vector<4x256xf32>
    %33 = arith.mulf %32, %30 : vector<4x256xf32>
    %34 = arith.addf %24, %33 : vector<4x256xf32>
    %35 = vector.broadcast %31 : vector<1x256xf32> to vector<4x256xf32>
    %36 = arith.mulf %35, %33 : vector<4x256xf32>
    %37 = arith.addf %27, %36 : vector<4x256xf32>
    %38 = arith.addf %28, %30 : vector<4x256xf32>
    %c3 = arith.constant 3 : index
    %c0_26 = arith.constant 0 : index
    %c0_27 = arith.constant 0 : index
    %39 = vector.load %arg1[%c3, %c0_26, %c0_27] : memref<8x4x256xf32, #tpu.memory_space<vmem>>, vector<1x4x256xf32>
    %40 = vector.shape_cast %39 : vector<1x4x256xf32> to vector<4x256xf32>
    %c3_28 = arith.constant 3 : index
    %c0_29 = arith.constant 0 : index
    %41 = vector.load %arg2[%c3_28, %c0_29] : memref<8x256xf32, #tpu.memory_space<vmem>>, vector<1x256xf32>
    %42 = vector.broadcast %41 : vector<1x256xf32> to vector<4x256xf32>
    %43 = arith.mulf %42, %40 : vector<4x256xf32>
    %44 = arith.addf %34, %43 : vector<4x256xf32>
    %45 = vector.broadcast %41 : vector<1x256xf32> to vector<4x256xf32>
    %46 = arith.mulf %45, %43 : vector<4x256xf32>
    %47 = arith.addf %37, %46 : vector<4x256xf32>
    %48 = arith.addf %38, %40 : vector<4x256xf32>
    %c4 = arith.constant 4 : index
    %c0_30 = arith.constant 0 : index
    %c0_31 = arith.constant 0 : index
    %49 = vector.load %arg1[%c4, %c0_30, %c0_31] : memref<8x4x256xf32, #tpu.memory_space<vmem>>, vector<1x4x256xf32>
    %50 = vector.shape_cast %49 : vector<1x4x256xf32> to vector<4x256xf32>
    %c4_32 = arith.constant 4 : index
    %c0_33 = arith.constant 0 : index
    %51 = vector.load %arg2[%c4_32, %c0_33] : memref<8x256xf32, #tpu.memory_space<vmem>>, vector<1x256xf32>
    %52 = vector.broadcast %51 : vector<1x256xf32> to vector<4x256xf32>
    %53 = arith.mulf %52, %50 : vector<4x256xf32>
    %54 = arith.addf %44, %53 : vector<4x256xf32>
    %55 = vector.broadcast %51 : vector<1x256xf32> to vector<4x256xf32>
    %56 = arith.mulf %55, %53 : vector<4x256xf32>
    %57 = arith.addf %47, %56 : vector<4x256xf32>
    %58 = arith.addf %48, %50 : vector<4x256xf32>
    %c5 = arith.constant 5 : index
    %c0_34 = arith.constant 0 : index
    %c0_35 = arith.constant 0 : index
    %59 = vector.load %arg1[%c5, %c0_34, %c0_35] : memref<8x4x256xf32, #tpu.memory_space<vmem>>, vector<1x4x256xf32>
    %60 = vector.shape_cast %59 : vector<1x4x256xf32> to vector<4x256xf32>
    %c5_36 = arith.constant 5 : index
    %c0_37 = arith.constant 0 : index
    %61 = vector.load %arg2[%c5_36, %c0_37] : memref<8x256xf32, #tpu.memory_space<vmem>>, vector<1x256xf32>
    %62 = vector.broadcast %61 : vector<1x256xf32> to vector<4x256xf32>
    %63 = arith.mulf %62, %60 : vector<4x256xf32>
    %64 = arith.addf %54, %63 : vector<4x256xf32>
    %65 = vector.broadcast %61 : vector<1x256xf32> to vector<4x256xf32>
    %66 = arith.mulf %65, %63 : vector<4x256xf32>
    %67 = arith.addf %57, %66 : vector<4x256xf32>
    %68 = arith.addf %58, %60 : vector<4x256xf32>
    %c6 = arith.constant 6 : index
    %c0_38 = arith.constant 0 : index
    %c0_39 = arith.constant 0 : index
    %69 = vector.load %arg1[%c6, %c0_38, %c0_39] : memref<8x4x256xf32, #tpu.memory_space<vmem>>, vector<1x4x256xf32>
    %70 = vector.shape_cast %69 : vector<1x4x256xf32> to vector<4x256xf32>
    %c6_40 = arith.constant 6 : index
    %c0_41 = arith.constant 0 : index
    %71 = vector.load %arg2[%c6_40, %c0_41] : memref<8x256xf32, #tpu.memory_space<vmem>>, vector<1x256xf32>
    %72 = vector.broadcast %71 : vector<1x256xf32> to vector<4x256xf32>
    %73 = arith.mulf %72, %70 : vector<4x256xf32>
    %74 = arith.addf %64, %73 : vector<4x256xf32>
    %75 = vector.broadcast %71 : vector<1x256xf32> to vector<4x256xf32>
    %76 = arith.mulf %75, %73 : vector<4x256xf32>
    %77 = arith.addf %67, %76 : vector<4x256xf32>
    %78 = arith.addf %68, %70 : vector<4x256xf32>
    %c7 = arith.constant 7 : index
    %c0_42 = arith.constant 0 : index
    %c0_43 = arith.constant 0 : index
    %79 = vector.load %arg1[%c7, %c0_42, %c0_43] : memref<8x4x256xf32, #tpu.memory_space<vmem>>, vector<1x4x256xf32>
    %80 = vector.shape_cast %79 : vector<1x4x256xf32> to vector<4x256xf32>
    %c7_44 = arith.constant 7 : index
    %c0_45 = arith.constant 0 : index
    %81 = vector.load %arg2[%c7_44, %c0_45] : memref<8x256xf32, #tpu.memory_space<vmem>>, vector<1x256xf32>
    %82 = vector.broadcast %81 : vector<1x256xf32> to vector<4x256xf32>
    %83 = arith.mulf %82, %80 : vector<4x256xf32>
    %84 = arith.addf %74, %83 : vector<4x256xf32>
    %85 = vector.broadcast %81 : vector<1x256xf32> to vector<4x256xf32>
    %86 = arith.mulf %85, %83 : vector<4x256xf32>
    %87 = arith.addf %77, %86 : vector<4x256xf32>
    %88 = arith.addf %78, %80 : vector<4x256xf32>
    %89 = arith.mulf %84, %84 : vector<4x256xf32>
    %c0_46 = arith.constant 0 : index
    %c0_47 = arith.constant 0 : index
    %90 = vector.load %arg3[%c0_46, %c0_47] : memref<1x256xf32, #tpu.memory_space<vmem>>, vector<1x256xf32>
    %cst_48 = arith.constant dense<0.000000e+00> : vector<13x256xf32>
    %91 = tpu.matmul %0, %87, %cst_48 {dimension_numbers = #tpu.dot_dimension_numbers<[1], [0], [0], [1], [0, 0, 1, 1], [], []>} : vector<13x4xf32>, vector<4x256xf32>, vector<13x256xf32> -> vector<13x256xf32>
    %cst_49 = arith.constant dense<0.000000e+00> : vector<13x256xf32>
    %92 = tpu.matmul %1, %89, %cst_49 {dimension_numbers = #tpu.dot_dimension_numbers<[1], [0], [0], [1], [0, 0, 1, 1], [], []>} : vector<13x4xf32>, vector<4x256xf32>, vector<13x256xf32> -> vector<13x256xf32>
    %93 = arith.addf %91, %92 : vector<13x256xf32>
    %cst_50 = arith.constant dense<0.000000e+00> : vector<13x256xf32>
    %94 = tpu.matmul %2, %88, %cst_50 {dimension_numbers = #tpu.dot_dimension_numbers<[1], [0], [0], [1], [0, 0, 1, 1], [], []>} : vector<13x4xf32>, vector<4x256xf32>, vector<13x256xf32> -> vector<13x256xf32>
    %95 = arith.addf %93, %94 : vector<13x256xf32>
    %96 = vector.broadcast %3 : vector<13x1xf32> to vector<13x256xf32>
    %97 = vector.broadcast %90 : vector<1x256xf32> to vector<13x256xf32>
    %98 = arith.mulf %96, %97 : vector<13x256xf32>
    %99 = arith.addf %95, %98 : vector<13x256xf32>
    %100 = vector.broadcast %4 : vector<13x1xf32> to vector<13x256xf32>
    %101 = arith.addf %99, %100 : vector<13x256xf32>
    %cst_51 = arith.constant 2.000000e+01 : f32
    %102 = vector.broadcast %cst_51 : f32 to vector<13x256xf32>
    %103 = arith.cmpf ogt, %101, %102 : vector<13x256xf32>
    %104 = math.exp %101 : vector<13x256xf32>
    %105 = math.log1p %104 : vector<13x256xf32>
    %106 = arith.select %103, %101, %105 : vector<13x256xi1>, vector<13x256xf32>
    %cst_52 = arith.constant dense<0.000000e+00> : vector<1x256xf32>
    %107 = tpu.matmul %5, %106, %cst_52 {dimension_numbers = #tpu.dot_dimension_numbers<[1], [0], [0], [1], [0, 0, 1, 1], [], []>} : vector<1x13xf32>, vector<13x256xf32>, vector<1x256xf32> -> vector<1x256xf32>
    %c0_53 = arith.constant 0 : index
    %c0_54 = arith.constant 0 : index
    %108 = vector.load %arg9[%c0_53, %c0_54] : memref<1x256xf32, #tpu.memory_space<vmem>>, vector<1x256xf32>
    tpu.vector_store %arg9[%c0_53, %c0_54], %107 {strides = array<i32>} : memref<1x256xf32, #tpu.memory_space<vmem>>, vector<1x256xf32>,
    return
  }
  func.func @transform_0(%arg0: i32) -> (i32, i32, i32) {
    %c0_i32 = arith.constant 0 : i32
    %c0_i32_0 = arith.constant 0 : i32
    %c0_i32_1 = arith.constant 0 : i32
    return %c0_i32, %c0_i32_0, %arg0 : i32, i32, i32
  }
  func.func @transform_1(%arg0: i32) -> (i32, i32) {
    %c0_i32 = arith.constant 0 : i32
    %c0_i32_0 = arith.constant 0 : i32
    return %c0_i32, %arg0 : i32, i32
  }
  func.func @transform_2(%arg0: i32) -> (i32, i32) {
    %c0_i32 = arith.constant 0 : i32
    %c0_i32_0 = arith.constant 0 : i32
    return %c0_i32, %arg0 : i32, i32
  }
  func.func @transform_3(%arg0: i32) -> (i32, i32) {
    %c0_i32 = arith.constant 0 : i32
    %c0_i32_0 = arith.constant 0 : i32
    %c0_i32_1 = arith.constant 0 : i32
    return %c0_i32, %c0_i32_0 : i32, i32
  }
  func.func @transform_4(%arg0: i32) -> (i32, i32) {
    %c0_i32 = arith.constant 0 : i32
    %c0_i32_0 = arith.constant 0 : i32
    %c0_i32_1 = arith.constant 0 : i32
    return %c0_i32, %c0_i32_0 : i32, i32
  }
  func.func @transform_5(%arg0: i32) -> (i32, i32) {
    %c0_i32 = arith.constant 0 : i32
    %c0_i32_0 = arith.constant 0 : i32
    %c0_i32_1 = arith.constant 0 : i32
    return %c0_i32, %c0_i32_0 : i32, i32
  }
  func.func @transform_6(%arg0: i32) -> (i32, i32) {
    %c0_i32 = arith.constant 0 : i32
    %c0_i32_0 = arith.constant 0 : i32
    %c0_i32_1 = arith.constant 0 : i32
    return %c0_i32, %c0_i32_0 : i32, i32
  }
  func.func @transform_7(%arg0: i32) -> (i32, i32) {
    %c0_i32 = arith.constant 0 : i32
    %c0_i32_0 = arith.constant 0 : i32
    %c0_i32_1 = arith.constant 0 : i32
    return %c0_i32, %c0_i32_0 : i32, i32
  }
  func.func @transform_8(%arg0: i32) -> (i32, i32) {
    %c0_i32 = arith.constant 0 : i32
    %c0_i32_0 = arith.constant 0 : i32
    return %c0_i32, %arg0 : i32, i32
  }
}

</mosaic_0001>

<llo_original>
// kernel: tpu_custom_call.1
$region0: #{tpu_custom_call.1}
  #allocation0 [shape = 'u32[]', space=smem, size = 0x4, offset = 0x4, fixed_abs, tag = 'smem constant byte address 0x4 - core index']
  #allocation1 [shape = 'u32[144,128]{1,0:T(1,128)}', space=vmem, size = 0x12000, scoped, tag = 'internal scratch']
  %s0 = inlined_call_operand.hbm [shape: f32[8,4,300], index: 0, kind: input, shape index: {}]
  %s1 = inlined_call_operand.vmem [shape: f32[8,300], index: 1, kind: input, shape index: {}]
  %s2 = inlined_call_operand.vmem [shape: f32[1,300], index: 2, kind: input, shape index: {}]
  %s3 = inlined_call_operand.vmem [shape: f32[13,4], index: 3, kind: input, shape index: {}]
  %s4 = inlined_call_operand.vmem [shape: f32[13,4], index: 4, kind: input, shape index: {}]
  %s5 = inlined_call_operand.vmem [shape: f32[13,4], index: 5, kind: input, shape index: {}]
  %s6 = inlined_call_operand.vmem [shape: f32[13,2], index: 6, kind: input, shape index: {}]
  %s7 = inlined_call_operand.vmem [shape: f32[1,13], index: 7, kind: input, shape index: {}]
  %s8 = inlined_call_operand.hbm [shape: f32[1,300], index: 8, kind: output, shape index: {}]
  %s9 = sld [smem:[#allocation0]]
  $region69: #{tpu_custom_call.1} parent=0
    _
  %s11 = ssub.s32 1, %s9
  %s12 = scalar_select 0, %s11, %s9
  $region1: #{tpu_custom_call.1} parent=0
    #allocation2 [shape = 'u8[65536]{0}', space=vmem, size = 0x10000, scoped, tag = 'input window, operand 0']
    #allocation3 [shape = 's32[2]{0}', space=sflag, size = 0x8, scoped, tag = 'scoped memory for tpu_custom_call.1']
    #allocation4 [shape = 's32[2]{0}', space=sflag, size = 0x8, scoped, tag = 'scoped memory for tpu_custom_call.1']
    #allocation5 [shape = 'u8[2048]{0}', space=vmem, size = 0x800, scoped, tag = 'output window, operand 0']
    %13 = vsyncpa [#allocation3], 0
    %s14 = scalar_lea.sflag [#allocation3], 1
    %15 = vsyncpa %s14, 0
    %16 = vsyncpa [#allocation4], 0
    %s17 = scalar_lea.sflag [#allocation4], 1
    %18 = vsyncpa %s17, 0
    loop: start=0, step=1, limit=4
    $region2: #{tpu_custom_call.1} parent=1 // loop_pre_header
      _
    $region3: #{tpu_custom_call.1} parent=1 // loop_header
      %s20 = sphi 0, %s24
      %p21 = scmp.ge.s32.totalorder %s20, 4
      %s30 = sphi 0, %s32
      %s33 = sphi 0, %s30
      %s34 = sphi 0, %s33
      %s50 = sphi 0, %s34
      %s56 = sphi 0, %s58
      %s59 = sphi 0, %s56
      %s60 = sphi 0, %s59
      %s76 = sphi 0, %s60
      %s82 = sphi 0, %s84
      %s85 = sphi 0, %s82
      %s86 = sphi 0, %s85
      %s102 = sphi 0, %s86
      %s106 = sphi 0, %s106
      %s108 = sphi 0, %s106
      %s109 = sphi 0, %s108
      %s123 = sphi 0, %s109
      %s127 = sphi 0, %s127
      %s129 = sphi 0, %s127
      %s130 = sphi 0, %s129
      %s144 = sphi 0, %s130
      %s148 = sphi 0, %s148
      %s150 = sphi 0, %s148
      %s151 = sphi 0, %s150
      %s165 = sphi 0, %s151
      %s169 = sphi 0, %s169
      %s171 = sphi 0, %s169
      %s172 = sphi 0, %s171
      %s186 = sphi 0, %s172
      %s190 = sphi 0, %s190
      %s192 = sphi 0, %s190
      %s193 = sphi 0, %s192
      %s207 = sphi 0, %s193
      %s213 = sphi 0, %s215
      %s216 = sphi 0, %s213
      %s217 = sphi 0, %s216
      %s233 = sphi 0, %s217
    $region4: #{tpu_custom_call.1} parent=1 // loop_header_branch
      %23 = sbr.rel (%p21) target = $region8
    $region5: #{tpu_custom_call.1} parent=1 // loop_body
      %s25 = ssub.s32 %s20, 1
      %s26 = ssub.s32 %s20, 2
      %s27 = sadd.s32 %s20, 1
      %s28 = ssub.s32 %s20, %s27
      %p29 = scmp.eq.s32.totalorder %s28, 0
      %s31 = sadd.s32 %s30, 1
      %s32 = scalar_select %p29, %s30, %s31
      %p35 = pneg %p29
      %p36 = scmp.eq.s32.totalorder %s20, 1
      %p37 = por %p35, %p36
      %p38 = scmp.ne.s32.totalorder %s30, %s33
      %p39 = scmp.eq.s32.totalorder %s20, 0
      %p40 = por %p38, %p39
      %p41 = scmp.ne.s32.totalorder %s30, %s33
      %p42 = scmp.eq.s32.totalorder %s25, 1
      %p43 = por %p41, %p42
      %p44 = scmp.ne.s32.totalorder %s33, %s34
      %p45 = scmp.eq.s32.totalorder %s25, 0
      %p46 = por %p44, %p45
      %p47 = scmp.ne.s32.totalorder %s33, %s34
      %p48 = scmp.eq.s32.totalorder %s26, 1
      %p49 = por %p47, %p48
      %p51 = scmp.ne.s32.totalorder %s34, %s50
      %p52 = scmp.eq.s32.totalorder %s26, 0
      %p53 = por %p51, %p52
      %s54 = ssub.s32 %s20, %s27
      %p55 = scmp.eq.s32.totalorder %s54, 0
      %s57 = sadd.s32 %s56, 1
      %s58 = scalar_select %p55, %s56, %s57
      %p61 = pneg %p55
      %p62 = scmp.eq.s32.totalorder %s20, 1
      %p63 = por %p61, %p62
      %p64 = scmp.ne.s32.totalorder %s56, %s59
      %p65 = scmp.eq.s32.totalorder %s20, 0
      %p66 = por %p64, %p65
      %p67 = scmp.ne.s32.totalorder %s56, %s59
      %p68 = scmp.eq.s32.totalorder %s25, 1
      %p69 = por %p67, %p68
      %p70 = scmp.ne.s32.totalorder %s59, %s60
      %p71 = scmp.eq.s32.totalorder %s25, 0
      %p72 = por %p70, %p71
      %p73 = scmp.ne.s32.totalorder %s59, %s60
      %p74 = scmp.eq.s32.totalorder %s26, 1
      %p75 = por %p73, %p74
      %p77 = scmp.ne.s32.totalorder %s60, %s76
      %p78 = scmp.eq.s32.totalorder %s26, 0
      %p79 = por %p77, %p78
      %s80 = ssub.s32 %s20, %s27
      %p81 = scmp.eq.s32.totalorder %s80, 0
      %s83 = sadd.s32 %s82, 1
      %s84 = scalar_select %p81, %s82, %s83
      %p87 = pneg %p81
      %p88 = scmp.eq.s32.totalorder %s20, 1
      %p89 = por %p87, %p88
      %p90 = scmp.ne.s32.totalorder %s82, %s85
      %p91 = scmp.eq.s32.totalorder %s20, 0
      %p92 = por %p90, %p91
      %p93 = scmp.ne.s32.totalorder %s82, %s85
      %p94 = scmp.eq.s32.totalorder %s25, 1
      %p95 = por %p93, %p94
      %p96 = scmp.ne.s32.totalorder %s85, %s86
      %p97 = scmp.eq.s32.totalorder %s25, 0
      %p98 = por %p96, %p97
      %p99 = scmp.ne.s32.totalorder %s85, %s86
      %p100 = scmp.eq.s32.totalorder %s26, 1
      %p101 = por %p99, %p100
      %p103 = scmp.ne.s32.totalorder %s86, %s102
      %p104 = scmp.eq.s32.totalorder %s26, 0
      %p105 = por %p103, %p104
      %s107 = sadd.s32 %s106, 1
      %p110 = scmp.eq.s32.totalorder %s20, 1
      %p111 = scmp.ne.s32.totalorder %s106, %s108
      %p112 = scmp.eq.s32.totalorder %s20, 0
      %p113 = por %p111, %p112
      %p114 = scmp.ne.s32.totalorder %s106, %s108
      %p115 = scmp.eq.s32.totalorder %s25, 1
      %p116 = por %p114, %p115
      %p117 = scmp.ne.s32.totalorder %s108, %s109
      %p118 = scmp.eq.s32.totalorder %s25, 0
      %p119 = por %p117, %p118
      %p120 = scmp.ne.s32.totalorder %s108, %s109
      %p121 = scmp.eq.s32.totalorder %s26, 1
      %p122 = por %p120, %p121
      %p124 = scmp.ne.s32.totalorder %s109, %s123
      %p125 = scmp.eq.s32.totalorder %s26, 0
      %p126 = por %p124, %p125
      %s128 = sadd.s32 %s127, 1
      %p131 = scmp.eq.s32.totalorder %s20, 1
      %p132 = scmp.ne.s32.totalorder %s127, %s129
      %p133 = scmp.eq.s32.totalorder %s20, 0
      %p134 = por %p132, %p133
      %p135 = scmp.ne.s32.totalorder %s127, %s129
      %p136 = scmp.eq.s32.totalorder %s25, 1
      %p137 = por %p135, %p136
      %p138 = scmp.ne.s32.totalorder %s129, %s130
      %p139 = scmp.eq.s32.totalorder %s25, 0
      %p140 = por %p138, %p139
      %p141 = scmp.ne.s32.totalorder %s129, %s130
      %p142 = scmp.eq.s32.totalorder %s26, 1
      %p143 = por %p141, %p142
      %p145 = scmp.ne.s32.totalorder %s130, %s144
      %p146 = scmp.eq.s32.totalorder %s26, 0
      %p147 = por %p145, %p146
      %s149 = sadd.s32 %s148, 1
      %p152 = scmp.eq.s32.totalorder %s20, 1
      %p153 = scmp.ne.s32.totalorder %s148, %s150
      %p154 = scmp.eq.s32.totalorder %s20, 0
      %p155 = por %p153, %p154
      %p156 = scmp.ne.s32.totalorder %s148, %s150
      %p157 = scmp.eq.s32.totalorder %s25, 1
      %p158 = por %p156, %p157
      %p159 = scmp.ne.s32.totalorder %s150, %s151
      %p160 = scmp.eq.s32.totalorder %s25, 0
      %p161 = por %p159, %p160
      %p162 = scmp.ne.s32.totalorder %s150, %s151
      %p163 = scmp.eq.s32.totalorder %s26, 1
      %p164 = por %p162, %p163
      %p166 = scmp.ne.s32.totalorder %s151, %s165
      %p167 = scmp.eq.s32.totalorder %s26, 0
      %p168 = por %p166, %p167
      %s170 = sadd.s32 %s169, 1
      %p173 = scmp.eq.s32.totalorder %s20, 1
      %p174 = scmp.ne.s32.totalorder %s169, %s171
      %p175 = scmp.eq.s32.totalorder %s20, 0
      %p176 = por %p174, %p175
      %p177 = scmp.ne.s32.totalorder %s169, %s171
      %p178 = scmp.eq.s32.totalorder %s25, 1
      %p179 = por %p177, %p178
      %p180 = scmp.ne.s32.totalorder %s171, %s172
      %p181 = scmp.eq.s32.totalorder %s25, 0
      %p182 = por %p180, %p181
      %p183 = scmp.ne.s32.totalorder %s171, %s172
      %p184 = scmp.eq.s32.totalorder %s26, 1
      %p185 = por %p183, %p184
      %p187 = scmp.ne.s32.totalorder %s172, %s186
      %p188 = scmp.eq.s32.totalorder %s26, 0
      %p189 = por %p187, %p188
      %s191 = sadd.s32 %s190, 1
      %p194 = scmp.eq.s32.totalorder %s20, 1
      %p195 = scmp.ne.s32.totalorder %s190, %s192
      %p196 = scmp.eq.s32.totalorder %s20, 0
      %p197 = por %p195, %p196
      %p198 = scmp.ne.s32.totalorder %s190, %s192
      %p199 = scmp.eq.s32.totalorder %s25, 1
      %p200 = por %p198, %p199
      %p201 = scmp.ne.s32.totalorder %s192, %s193
      %p202 = scmp.eq.s32.totalorder %s25, 0
      %p203 = por %p201, %p202
      %p204 = scmp.ne.s32.totalorder %s192, %s193
      %p205 = scmp.eq.s32.totalorder %s26, 1
      %p206 = por %p204, %p205
      %p208 = scmp.ne.s32.totalorder %s193, %s207
      %p209 = scmp.eq.s32.totalorder %s26, 0
      %p210 = por %p208, %p209
      %s211 = ssub.s32 %s20, %s27
      %p212 = scmp.eq.s32.totalorder %s211, 0
      %s214 = sadd.s32 %s213, 1
      %s215 = scalar_select %p212, %s213, %s214
      %p218 = pneg %p212
      %p219 = scmp.eq.s32.totalorder %s20, 1
      %p220 = por %p218, %p219
      %p221 = scmp.ne.s32.totalorder %s213, %s216
      %p222 = scmp.eq.s32.totalorder %s20, 0
      %p223 = por %p221, %p222
      %p224 = scmp.ne.s32.totalorder %s213, %s216
      %p225 = scmp.eq.s32.totalorder %s25, 1
      %p226 = por %p224, %p225
      %p227 = scmp.ne.s32.totalorder %s216, %s217
      %p228 = scmp.eq.s32.totalorder %s25, 0
      %p229 = por %p227, %p228
      %p230 = scmp.ne.s32.totalorder %s216, %s217
      %p231 = scmp.eq.s32.totalorder %s26, 1
      %p232 = por %p230, %p231
      %p234 = scmp.ne.s32.totalorder %s217, %s233
      %p235 = scmp.eq.s32.totalorder %s26, 0
      %p236 = por %p234, %p235
      %p237 = scmp.le.s32.totalorder 1, %s20
      %p238 = scmp.lt.s32.totalorder %s20, 3
      %p239 = pnand %p237, %p238
      %p240 = pneg %p239
      // Predicated region
      $region9: #{tpu_custom_call.1} parent=5 // pred_check
        _
      $region10: #{tpu_custom_call.1} parent=5 // pred_check_branch
        %242 = sbr.rel (%p239) target = $region12
      $region11: #{tpu_custom_call.1} parent=5 // pred_region
        %s243 = ssub.s32 %s20, 1
        // Predicated region
        $region13: #{tpu_custom_call.1} parent=11 // pred_check
          %p244 = pneg %p119
        $region14: #{tpu_custom_call.1} parent=11 // pred_check_branch
          %246 = sbr.rel (%p244) target = $region16
        $region15: #{tpu_custom_call.1} parent=11 // pred_region
          _
        $region16: #{tpu_custom_call.1} parent=11 // pred_fallthru
          _
        // Predicated region
        $region17: #{tpu_custom_call.1} parent=11 // pred_check
          %p247 = pneg %p140
        $region18: #{tpu_custom_call.1} parent=11 // pred_check_branch
          %249 = sbr.rel (%p247) target = $region20
        $region19: #{tpu_custom_call.1} parent=11 // pred_region
          _
        $region20: #{tpu_custom_call.1} parent=11 // pred_fallthru
          _
        // Predicated region
        $region21: #{tpu_custom_call.1} parent=11 // pred_check
          %p250 = pneg %p161
        $region22: #{tpu_custom_call.1} parent=11 // pred_check_branch
          %252 = sbr.rel (%p250) target = $region24
        $region23: #{tpu_custom_call.1} parent=11 // pred_region
          _
        $region24: #{tpu_custom_call.1} parent=11 // pred_fallthru
          _
        // Predicated region
        $region25: #{tpu_custom_call.1} parent=11 // pred_check
          %p253 = pneg %p182
        $region26: #{tpu_custom_call.1} parent=11 // pred_check_branch
          %255 = sbr.rel (%p253) target = $region28
        $region27: #{tpu_custom_call.1} parent=11 // pred_region
          _
        $region28: #{tpu_custom_call.1} parent=11 // pred_fallthru
          _
        // Predicated region
        $region29: #{tpu_custom_call.1} parent=11 // pred_check
          %p256 = pneg %p203
        $region30: #{tpu_custom_call.1} parent=11 // pred_check_branch
          %258 = sbr.rel (%p256) target = $region32
        $region31: #{tpu_custom_call.1} parent=11 // pred_region
          _
        $region32: #{tpu_custom_call.1} parent=11 // pred_fallthru
          _
      $region12: #{tpu_custom_call.1} parent=5 // pred_fallthru
        _
      %p259 = scmp.lt.s32.totalorder %s20, 2
      // Predicated region
      $region33: #{tpu_custom_call.1} parent=5 // pred_check
        %p260 = pneg %p259
      $region34: #{tpu_custom_call.1} parent=5 // pred_check_branch
        %262 = sbr.rel (%p260) target = $region36
      $region35: #{tpu_custom_call.1} parent=5 // pred_region
        // Predicated region
        $region37: #{tpu_custom_call.1} parent=35 // pred_check
          %p263 = pneg %p40
        $region38: #{tpu_custom_call.1} parent=35 // pred_check_branch
          %265 = sbr.rel (%p263) target = $region40
        $region39: #{tpu_custom_call.1} parent=35 // pred_region
          %s266 = sand.u32 %s30, 1
          %s267 = scalar_lea.sflag [#allocation3], %s266
          %s268 = sand.u32 %s30, 1
          %s269 = smul.addr %s268, 64
          %s270 = scalar_lea.vmem [#allocation2], %s269
          %s271 = smul.u32 2, %s20
          %s272 = ssub.s32 3, %s271
          %p273 = scmp.lt.s32.totalorder %s272, 2
          %s274 = scalar_select %p273, %s272, 2
          %s275 = smul.u32 512, %s274
          %s277 = ssub.s32 1024, %s275
          %278 = vsyncadd %s267, %s277
          %p279 = scmp.ne.s32.totalorder 0, %s275
          %s280 = smul.addr %s271, 64
          %s281 = scalar_lea.hbm %s0, %s280
          %s282 = smul.u32 %s274, 4
          %s283 = smul.u32 %s282, 8
          %s284 = sshll.u32 %s270, 4
          %s285 = int_to_ptr.vmem [resolvable:$true] %s284
          %s286 = sshll.u32 %s283, 4
          %290 = dma.hbm_to_vmem [thread:$0]  (%p279), %s281, %s286, %s285, %s267, 192, 128, %s282
        $region40: #{tpu_custom_call.1} parent=35 // pred_fallthru
          _
        // Predicated region
        $region41: #{tpu_custom_call.1} parent=35 // pred_check
          %p291 = pneg %p66
        $region42: #{tpu_custom_call.1} parent=35 // pred_check_branch
          %293 = sbr.rel (%p291) target = $region44
        $region43: #{tpu_custom_call.1} parent=35 // pred_region
          %s294 = smul.u32 2, %s20
          %s295 = ssub.s32 3, %s294
          %p296 = scmp.lt.s32.totalorder %s295, 2
          %s297 = scalar_select %p296, %s295, 2
          %s298 = smul.u32 128, %s297
          %p299 = scmp.lt.s32.totalorder %s294, 2
          %s300 = scalar_select %p299, %s294, 2
          %s301 = smul.addr %s300, 8
          %s302 = scalar_lea.vmem %s1, %s301
          %s303 = smul.u32 2, %s20
          %s304 = ssub.s32 3, %s303
          %p305 = scmp.lt.s32.totalorder %s304, 2
          %s306 = scalar_select %p305, %s304, 2
          %s307 = smul.u32 128, %s306
        $region44: #{tpu_custom_call.1} parent=35 // pred_fallthru
          _
        // Predicated region
        $region45: #{tpu_custom_call.1} parent=35 // pred_check
          %p308 = pneg %p92
        $region46: #{tpu_custom_call.1} parent=35 // pred_check_branch
          %310 = sbr.rel (%p308) target = $region48
        $region47: #{tpu_custom_call.1} parent=35 // pred_region
          %s311 = smul.u32 2, %s20
          %s312 = ssub.s32 3, %s311
          %p313 = scmp.lt.s32.totalorder %s312, 2
          %s314 = scalar_select %p313, %s312, 2
          %s315 = smul.u32 16, %s314
          %p316 = scmp.lt.s32.totalorder %s311, 2
          %s317 = scalar_select %p316, %s311, 2
          %s318 = scalar_lea.vmem %s2, %s317
          %s319 = smul.u32 2, %s20
          %s320 = ssub.s32 3, %s319
          %p321 = scmp.lt.s32.totalorder %s320, 2
          %s322 = scalar_select %p321, %s320, 2
          %s323 = smul.u32 16, %s322
        $region48: #{tpu_custom_call.1} parent=35 // pred_fallthru
          _
      $region36: #{tpu_custom_call.1} parent=5 // pred_fallthru
        _
      %p324 = scmp.le.s32.totalorder 1, %s20
      %p325 = scmp.lt.s32.totalorder %s20, 3
      %p326 = pnand %p324, %p325
      %p327 = pneg %p326
      // Predicated region
      $region49: #{tpu_custom_call.1} parent=5 // pred_check
        _
      $region50: #{tpu_custom_call.1} parent=5 // pred_check_branch
        %329 = sbr.rel (%p326) target = $region52
      $region51: #{tpu_custom_call.1} parent=5 // pred_region
        %s330 = ssub.s32 %s20, 1
        %s331 = sand.u32 %s33, 1
        %s332 = scalar_lea.sflag [#allocation3], %s331
        %s333 = sand.u32 %s33, 1
        %s334 = smul.addr %s333, 64
        %s335 = scalar_lea.vmem [#allocation2], %s334
        // Predicated region
        $region53: #{tpu_custom_call.1} parent=51 // pred_check
          %p336 = pneg %p46
        $region54: #{tpu_custom_call.1} parent=51 // pred_check_branch
          %338 = sbr.rel (%p336) target = $region56
        $region55: #{tpu_custom_call.1} parent=51 // pred_region
          %339 = dma.done %s332, 1024
        $region56: #{tpu_custom_call.1} parent=51 // pred_fallthru
          _
        %s340 = sand.u32 %s33, 1
        %s341 = scalar_lea.sflag [#allocation3], %s340
        %s342 = sand.u32 %s33, 1
        %s343 = smul.addr %s342, 64
        %s344 = scalar_lea.vmem [#allocation2], %s343
        %p345 = pneg %p46
        %p346 = pneg %p43
        %s347 = smul.u32 2, %s25
        %s348 = ssub.s32 3, %s347
        %p349 = scmp.lt.s32.totalorder %s348, 2
        %s350 = scalar_select %p349, %s348, 2
        %s351 = smul.u32 128, %s350
        %p352 = scmp.lt.s32.totalorder %s347, 2
        %s353 = scalar_select %p352, %s347, 2
        %s354 = smul.addr %s353, 8
        %s355 = scalar_lea.vmem %s1, %s354
        %p356 = pneg %p72
        %p357 = pneg %p69
        %s358 = smul.u32 2, %s25
        %s359 = ssub.s32 3, %s358
        %p360 = scmp.lt.s32.totalorder %s359, 2
        %s361 = scalar_select %p360, %s359, 2
        %s362 = smul.u32 16, %s361
        %p363 = scmp.lt.s32.totalorder %s358, 2
        %s364 = scalar_select %p363, %s358, 2
        %s365 = scalar_lea.vmem %s2, %s364
        %p366 = pneg %p98
        %p367 = pneg %p95
        %p368 = pneg %p119
        %p369 = pneg %p116
        %p370 = pneg %p140
        %p371 = pneg %p137
        %p372 = pneg %p161
        %p373 = pneg %p158
        %p374 = pneg %p182
        %p375 = pneg %p179
        %p376 = pneg %p203
        %p377 = pneg %p200
        %p378 = pneg %p229
        %p379 = pneg %p226
        %s380 = sand.u32 %s216, 1
        %s381 = scalar_lea.sflag [#allocation4], %s380
        %s382 = sand.u32 %s216, 1
        %s383 = smul.addr %s382, 2
        %s384 = scalar_lea.vmem [#allocation5], %s383
        %s385 = smul.u32 2, %s25
        %s386 = ssub.s32 3, %s385
        %p387 = scmp.lt.s32.totalorder %s386, 2
        %s388 = scalar_select %p387, %s386, 2
        %s389 = smul.u32 512, %s388
        %s390 = smul.u32 2, %s25
        %s391 = ssub.s32 3, %s390
        %p392 = scmp.lt.s32.totalorder %s391, 2
        %s393 = scalar_select %p392, %s391, 2
        %s394 = smul.u32 128, %s393
        %p395 = scmp.lt.s32.totalorder %s390, 2
        %s396 = scalar_select %p395, %s390, 2
        %s397 = smul.addr %s396, 8
        %s398 = scalar_lea.vmem %s1, %s397
        %s399 = smul.u32 2, %s25
        %s400 = ssub.s32 3, %s399
        %p401 = scmp.lt.s32.totalorder %s400, 2
        %s402 = scalar_select %p401, %s400, 2
        %s403 = smul.u32 128, %s402
        %s404 = smul.u32 2, %s25
        %s405 = ssub.s32 3, %s404
        %p406 = scmp.lt.s32.totalorder %s405, 2
        %s407 = scalar_select %p406, %s405, 2
        %s408 = smul.u32 16, %s407
        %p409 = scmp.lt.s32.totalorder %s404, 2
        %s410 = scalar_select %p409, %s404, 2
        %s411 = scalar_lea.vmem %s2, %s410
        %s412 = smul.u32 2, %s25
        %s413 = ssub.s32 3, %s412
        %p414 = scmp.lt.s32.totalorder %s413, 2
        %s415 = scalar_select %p414, %s413, 2
        %s416 = smul.u32 16, %s415
        %s417 = smul.u32 2, %s25
        %s418 = ssub.s32 3, %s417
        %p419 = scmp.lt.s32.totalorder %s418, 2
        %s420 = scalar_select %p419, %s418, 2
        %s421 = smul.u32 16, %s420
        %v422 = vld [vmem:[%s3] sm:$0xff]
        %v423 = vld [vmem:[%s3 + $0x8] sm:$0x1f]
        %v424 = vld [vmem:[%s4] sm:$0xff]
        %v425 = vld [vmem:[%s4 + $0x8] sm:$0x1f]
        %v426 = vld [vmem:[%s5] sm:$0xff]
        %v427 = vld [vmem:[%s5 + $0x8] sm:$0x1f]
        %v428 = vld [vmem:[%s6] sm:$0xff]
        %v429 = vld [vmem:[%s6 + $0x8] sm:$0x1f]
        %v430 = vld [vmem:[%s7] sm:$0x1]
        %v431 = vld [vmem:[%s335] sm:$0xff]
        %v432 = vld [vmem:[%s398] ss:$8 sm:$0x3]
        %v434 = vlaneseq
        %v435 = vshrl.u32 %v434, 7
        %v436 = vsub.s32 0, %v435
        %v437 = vrot.slane %v432, %v436
        %v438 = vlaneseq
        %v439 = vshrl.u32 %v438, 7
        %v440 = vsub.s32 1, %v439
        %v441 = vrot.slane %v432, %v440
        %v445 = vcombine.high %v431, %v431
        %v447 = vmul.f32 %v437, %v431
        %v448 = vmul.f32 %v441, %v445
        %v449 = vadd.f32 %v447, 0.0
        %v450 = vadd.f32 %v448, 0.0
        %v451 = vmul.f32 %v437, %v447
        %v452 = vmul.f32 %v441, %v448
        %v453 = vadd.f32 %v451, 0.0
        %v454 = vadd.f32 %v452, 0.0
        %v455 = vadd.f32 %v431, 0.0
        %s456 = scalar_lea.vmem %s335, 8 [#allocation2]
        %v457 = vld [vmem:[%s456] sm:$0xff]
        %s458 = scalar_lea.vmem %s398, 1
        %v459 = vld [vmem:[%s458] ss:$8 sm:$0x3]
        %v461 = vlaneseq
        %v462 = vshrl.u32 %v461, 7
        %v463 = vsub.s32 0, %v462
        %v464 = vrot.slane %v459, %v463
        %v465 = vlaneseq
        %v466 = vshrl.u32 %v465, 7
        %v467 = vsub.s32 1, %v466
        %v468 = vrot.slane %v459, %v467
        %v472 = vcombine.high %v457, %v457
        %v474 = vmul.f32 %v464, %v457
        %v475 = vmul.f32 %v468, %v472
        %v476 = vadd.f32 %v449, %v474
        %v477 = vadd.f32 %v450, %v475
        %v478 = vmul.f32 %v464, %v474
        %v479 = vmul.f32 %v468, %v475
        %v480 = vadd.f32 %v453, %v478
        %v481 = vadd.f32 %v454, %v479
        %v482 = vadd.f32 %v455, %v457
        %s483 = scalar_lea.vmem %s335, 16 [#allocation2]
        %v484 = vld [vmem:[%s483] sm:$0xff]
        %s485 = scalar_lea.vmem %s398, 2
        %v486 = vld [vmem:[%s485] ss:$8 sm:$0x3]
        %v488 = vlaneseq
        %v489 = vshrl.u32 %v488, 7
        %v490 = vsub.s32 0, %v489
        %v491 = vrot.slane %v486, %v490
        %v492 = vlaneseq
        %v493 = vshrl.u32 %v492, 7
        %v494 = vsub.s32 1, %v493
        %v495 = vrot.slane %v486, %v494
        %v499 = vcombine.high %v484, %v484
        %v501 = vmul.f32 %v491, %v484
        %v502 = vmul.f32 %v495, %v499
        %v503 = vadd.f32 %v476, %v501
        %v504 = vadd.f32 %v477, %v502
        %v505 = vmul.f32 %v491, %v501
        %v506 = vmul.f32 %v495, %v502
        %v507 = vadd.f32 %v480, %v505
        %v508 = vadd.f32 %v481, %v506
        %v509 = vadd.f32 %v482, %v484
        %s510 = scalar_lea.vmem %s335, 24 [#allocation2]
        %v511 = vld [vmem:[%s510] sm:$0xff]
        %s512 = scalar_lea.vmem %s398, 3
        %v513 = vld [vmem:[%s512] ss:$8 sm:$0x3]
        %v515 = vlaneseq
        %v516 = vshrl.u32 %v515, 7
        %v517 = vsub.s32 0, %v516
        %v518 = vrot.slane %v513, %v517
        %v519 = vlaneseq
        %v520 = vshrl.u32 %v519, 7
        %v521 = vsub.s32 1, %v520
        %v522 = vrot.slane %v513, %v521
        %v526 = vcombine.high %v511, %v511
        %v528 = vmul.f32 %v518, %v511
        %v529 = vmul.f32 %v522, %v526
        %v530 = vadd.f32 %v503, %v528
        %v531 = vadd.f32 %v504, %v529
        %v532 = vmul.f32 %v518, %v528
        %v533 = vmul.f32 %v522, %v529
        %v534 = vadd.f32 %v507, %v532
        %v535 = vadd.f32 %v508, %v533
        %v536 = vadd.f32 %v509, %v511
        %s537 = scalar_lea.vmem %s335, 32 [#allocation2]
        %v538 = vld [vmem:[%s537] sm:$0xff]
        %s539 = scalar_lea.vmem %s398, 4
        %v540 = vld [vmem:[%s539] ss:$8 sm:$0x3]
        %v542 = vlaneseq
        %v543 = vshrl.u32 %v542, 7
        %v544 = vsub.s32 0, %v543
        %v545 = vrot.slane %v540, %v544
        %v546 = vlaneseq
        %v547 = vshrl.u32 %v546, 7
        %v548 = vsub.s32 1, %v547
        %v549 = vrot.slane %v540, %v548
        %v553 = vcombine.high %v538, %v538
        %v555 = vmul.f32 %v545, %v538
        %v556 = vmul.f32 %v549, %v553
        %v557 = vadd.f32 %v530, %v555
        %v558 = vadd.f32 %v531, %v556
        %v559 = vmul.f32 %v545, %v555
        %v560 = vmul.f32 %v549, %v556
        %v561 = vadd.f32 %v534, %v559
        %v562 = vadd.f32 %v535, %v560
        %v563 = vadd.f32 %v536, %v538
        %s564 = scalar_lea.vmem %s335, 40 [#allocation2]
        %v565 = vld [vmem:[%s564] sm:$0xff]
        %s566 = scalar_lea.vmem %s398, 5
        %v567 = vld [vmem:[%s566] ss:$8 sm:$0x3]
        %v569 = vlaneseq
        %v570 = vshrl.u32 %v569, 7
        %v571 = vsub.s32 0, %v570
        %v572 = vrot.slane %v567, %v571
        %v573 = vlaneseq
        %v574 = vshrl.u32 %v573, 7
        %v575 = vsub.s32 1, %v574
        %v576 = vrot.slane %v567, %v575
        %v580 = vcombine.high %v565, %v565
        %v582 = vmul.f32 %v572, %v565
        %v583 = vmul.f32 %v576, %v580
        %v584 = vadd.f32 %v557, %v582
        %v585 = vadd.f32 %v558, %v583
        %v586 = vmul.f32 %v572, %v582
        %v587 = vmul.f32 %v576, %v583
        %v588 = vadd.f32 %v561, %v586
        %v589 = vadd.f32 %v562, %v587
        %v590 = vadd.f32 %v563, %v565
        %s591 = scalar_lea.vmem %s335, 48 [#allocation2]
        %v592 = vld [vmem:[%s591] sm:$0xff]
        %s593 = scalar_lea.vmem %s398, 6
        %v594 = vld [vmem:[%s593] ss:$8 sm:$0x3]
        %v596 = vlaneseq
        %v597 = vshrl.u32 %v596, 7
        %v598 = vsub.s32 0, %v597
        %v599 = vrot.slane %v594, %v598
        %v600 = vlaneseq
        %v601 = vshrl.u32 %v600, 7
        %v602 = vsub.s32 1, %v601
        %v603 = vrot.slane %v594, %v602
        %v607 = vcombine.high %v592, %v592
        %v609 = vmul.f32 %v599, %v592
        %v610 = vmul.f32 %v603, %v607
        %v611 = vadd.f32 %v584, %v609
        %v612 = vadd.f32 %v585, %v610
        %v613 = vmul.f32 %v599, %v609
        %v614 = vmul.f32 %v603, %v610
        %v615 = vadd.f32 %v588, %v613
        %v616 = vadd.f32 %v589, %v614
        %v617 = vadd.f32 %v590, %v592
        %s618 = scalar_lea.vmem %s335, 56 [#allocation2]
        %v619 = vld [vmem:[%s618] sm:$0xff]
        %s620 = scalar_lea.vmem %s398, 7
        %v621 = vld [vmem:[%s620] ss:$8 sm:$0x3]
        %v623 = vlaneseq
        %v624 = vshrl.u32 %v623, 7
        %v625 = vsub.s32 0, %v624
        %v626 = vrot.slane %v621, %v625
        %v627 = vlaneseq
        %v628 = vshrl.u32 %v627, 7
        %v629 = vsub.s32 1, %v628
        %v630 = vrot.slane %v621, %v629
        %v634 = vcombine.high %v619, %v619
        %v636 = vmul.f32 %v626, %v619
        %v637 = vmul.f32 %v630, %v634
        %v638 = vadd.f32 %v611, %v636
        %v639 = vadd.f32 %v612, %v637
        %v640 = vmul.f32 %v626, %v636
        %v641 = vmul.f32 %v630, %v637
        %v642 = vadd.f32 %v615, %v640
        %v643 = vadd.f32 %v616, %v641
        %v644 = vadd.f32 %v617, %v619
        %v645 = vmul.f32 %v638, %v638
        %v646 = vmul.f32 %v639, %v639
        %v647 = vld [vmem:[%s411] sm:$0x3]
        %vm648 = vcmask 31744
        %v650 = vsel %vm648, %v424, 0
        %v653 = vsel %vm648, %v425, 0
        %vm655 = vcmask 1043456
        %v657 = vsel %vm655, %v645, 0
        %v660 = vsel %vm655, %v646, 0
        %662 = vmatprep.subr.mxu0 %v660
        %663 = vmatpush1.msra.mxu0 %v657
        %664 = vmatprep.subr.mxu0 0.0
        %665 = vmatpush1.msra.mxu0 0.0
        %666 = vmatprep.subr.mxu0 0.0
        %667 = vmatpush1.msra.mxu0 0.0
        %668 = vmatprep.subr.mxu0 0.0
        %669 = vmatpush1.msra.mxu0 0.0
        %670 = vmatprep.subr.mxu0 0.0
        %671 = vmatpush1.msra.mxu0 0.0
        %672 = vmatprep.subr.mxu0 0.0
        %673 = vmatpush1.msra.mxu0 0.0
        %674 = vmatprep.subr.mxu0 0.0
        %675 = vmatpush1.msra.mxu0 0.0
        %676 = vmatprep.subr.mxu0 0.0
        %677 = vmatpush1.msra.mxu0 0.0
        %678 = vmatprep.subr.mxu0 0.0
        %679 = vmatpush1.msra.mxu0 0.0
        %680 = vmatprep.subr.mxu0 0.0
        %681 = vmatpush1.msra.mxu0 0.0
        %682 = vmatprep.subr.mxu0 0.0
        %683 = vmatpush1.msra.mxu0 0.0
        %684 = vmatprep.subr.mxu0 0.0
        %685 = vmatpush1.msra.mxu0 0.0
        %686 = vmatprep.subr.mxu0 0.0
        %687 = vmatpush1.msra.mxu0 0.0
        %688 = vmatprep.subr.mxu0 0.0
        %689 = vmatpush1.msra.mxu0 0.0
        %690 = vmatprep.subr.mxu0 0.0
        %691 = vmatpush1.msra.mxu0 0.0
        %692 = vmatprep.subr.mxu0 0.0
        %693 = vmatpush1.msra.mxu0 0.0
        %694 = vmatprep.subr.mxu0 0.0
        %695 = vmatpush1.msra.mxu0 0.0
        %696 = vmatprep.subr.mxu0 0.0
        %697 = vmatpush1.msra.mxu0 0.0
        %698 = vmatprep.subr.mxu0 0.0
        %699 = vmatpush1.msra.mxu0 0.0
        %700 = vmatprep.subr.mxu0 0.0
        %701 = vmatpush1.msra.mxu0 0.0
        %702 = vmatprep.subr.mxu0 0.0
        %703 = vmatpush1.msra.mxu0 0.0
        %704 = vmatprep.subr.mxu0 0.0
        %705 = vmatpush1.msra.mxu0 0.0
        %706 = vmatprep.subr.mxu0 0.0
        %707 = vmatpush1.msra.mxu0 0.0
        %708 = vmatprep.subr.mxu0 0.0
        %709 = vmatpush1.msra.mxu0 0.0
        %710 = vmatprep.subr.mxu0 0.0
        %711 = vmatpush1.msra.mxu0 0.0
        %712 = vmatprep.subr.mxu0 0.0
        %713 = vmatpush1.msra.mxu0 0.0
        %714 = vmatprep.subr.mxu0 0.0
        %715 = vmatpush1.msra.mxu0 0.0
        %716 = vmatprep.subr.mxu0 0.0
        %717 = vmatpush1.msra.mxu0 0.0
        %718 = vmatprep.subr.mxu0 0.0
        %719 = vmatpush1.msra.mxu0 0.0
        %720 = vmatprep.subr.mxu0 0.0
        %721 = vmatpush1.msra.mxu0 0.0
        %722 = vmatprep.subr.mxu0 0.0
        %723 = vmatpush1.msra.mxu0 0.0
        %724 = vmatprep.subr.mxu0 0.0
        %725 = vmatpush1.msra.mxu0 0.0
        %726 = vmatprep.mubr.f32.mxu0 0.0
        %727 = vmatmul.mubr.f32.gmra.mrb[0].mxu0 %v650
        %v728 = vpop.f32.mrb[0].mxu0
        %v729 = vadd.f32 0.0, %v728
        %v730 = vpop.f32.mrb[0].mxu0
        %v731 = vadd.f32 0.0, %v730
        %732 = vmatprep.mubr.f32.mxu0 0.0
        %733 = vmatmul.mubr.f32.gmra.mrb[0].mxu0 %v653
        %v734 = vpop.f32.mrb[0].mxu0
        %v735 = vadd.f32 0.0, %v734
        %v736 = vpop.f32.mrb[0].mxu0
        %v737 = vadd.f32 0.0, %v736
        %738 = vdwg.mxu0
        %v740 = vsel %vm648, %v422, 0
        %v743 = vsel %vm648, %v423, 0
        %v746 = vsel %vm655, %v642, 0
        %v749 = vsel %vm655, %v643, 0
        %751 = vmatprep.subr.mxu0 %v749
        %752 = vmatpush1.msra.mxu0 %v746
        %753 = vmatprep.subr.mxu0 0.0
        %754 = vmatpush1.msra.mxu0 0.0
        %755 = vmatprep.subr.mxu0 0.0
        %756 = vmatpush1.msra.mxu0 0.0
        %757 = vmatprep.subr.mxu0 0.0
        %758 = vmatpush1.msra.mxu0 0.0
        %759 = vmatprep.subr.mxu0 0.0
        %760 = vmatpush1.msra.mxu0 0.0
        %761 = vmatprep.subr.mxu0 0.0
        %762 = vmatpush1.msra.mxu0 0.0
        %763 = vmatprep.subr.mxu0 0.0
        %764 = vmatpush1.msra.mxu0 0.0
        %765 = vmatprep.subr.mxu0 0.0
        %766 = vmatpush1.msra.mxu0 0.0
        %767 = vmatprep.subr.mxu0 0.0
        %768 = vmatpush1.msra.mxu0 0.0
        %769 = vmatprep.subr.mxu0 0.0
        %770 = vmatpush1.msra.mxu0 0.0
        %771 = vmatprep.subr.mxu0 0.0
        %772 = vmatpush1.msra.mxu0 0.0
        %773 = vmatprep.subr.mxu0 0.0
        %774 = vmatpush1.msra.mxu0 0.0
        %775 = vmatprep.subr.mxu0 0.0
        %776 = vmatpush1.msra.mxu0 0.0
        %777 = vmatprep.subr.mxu0 0.0
        %778 = vmatpush1.msra.mxu0 0.0
        %779 = vmatprep.subr.mxu0 0.0
        %780 = vmatpush1.msra.mxu0 0.0
        %781 = vmatprep.subr.mxu0 0.0
        %782 = vmatpush1.msra.mxu0 0.0
        %783 = vmatprep.subr.mxu0 0.0
        %784 = vmatpush1.msra.mxu0 0.0
        %785 = vmatprep.subr.mxu0 0.0
        %786 = vmatpush1.msra.mxu0 0.0
        %787 = vmatprep.subr.mxu0 0.0
        %788 = vmatpush1.msra.mxu0 0.0
        %789 = vmatprep.subr.mxu0 0.0
        %790 = vmatpush1.msra.mxu0 0.0
        %791 = vmatprep.subr.mxu0 0.0
        %792 = vmatpush1.msra.mxu0 0.0
        %793 = vmatprep.subr.mxu0 0.0
        %794 = vmatpush1.msra.mxu0 0.0
        %795 = vmatprep.subr.mxu0 0.0
        %796 = vmatpush1.msra.mxu0 0.0
        %797 = vmatprep.subr.mxu0 0.0
        %798 = vmatpush1.msra.mxu0 0.0
        %799 = vmatprep.subr.mxu0 0.0
        %800 = vmatpush1.msra.mxu0 0.0
        %801 = vmatprep.subr.mxu0 0.0
        %802 = vmatpush1.msra.mxu0 0.0
        %803 = vmatprep.subr.mxu0 0.0
        %804 = vmatpush1.msra.mxu0 0.0
        %805 = vmatprep.subr.mxu0 0.0
        %806 = vmatpush1.msra.mxu0 0.0
        %807 = vmatprep.subr.mxu0 0.0
        %808 = vmatpush1.msra.mxu0 0.0
        %809 = vmatprep.subr.mxu0 0.0
        %810 = vmatpush1.msra.mxu0 0.0
        %811 = vmatprep.subr.mxu0 0.0
        %812 = vmatpush1.msra.mxu0 0.0
        %813 = vmatprep.subr.mxu0 0.0
        %814 = vmatpush1.msra.mxu0 0.0
        %815 = vmatprep.mubr.f32.mxu0 0.0
        %816 = vmatmul.mubr.f32.gmra.mrb[0].mxu0 %v740
        %v817 = vpop.f32.mrb[0].mxu0
        %v818 = vadd.f32 %v729, %v817
        %v819 = vpop.f32.mrb[0].mxu0
        %v820 = vadd.f32 %v731, %v819
        %821 = vmatprep.mubr.f32.mxu0 0.0
        %822 = vmatmul.mubr.f32.gmra.mrb[0].mxu0 %v743
        %v823 = vpop.f32.mrb[0].mxu0
        %v824 = vadd.f32 %v735, %v823
        %v825 = vpop.f32.mrb[0].mxu0
        %v826 = vadd.f32 %v737, %v825
        %827 = vdwg.mxu0
        %v829 = vcombine.high %v644, %v644
        %v831 = vsel %vm648, %v426, 0
        %v834 = vsel %vm648, %v427, 0
        %v836 = vsel %vm655, %v644, 0
        %v838 = vsel %vm655, %v829, 0
        %840 = vmatprep.subr.mxu0 %v838
        %841 = vmatpush1.msra.mxu0 %v836
        %842 = vmatprep.subr.mxu0 0.0
        %843 = vmatpush1.msra.mxu0 0.0
        %844 = vmatprep.subr.mxu0 0.0
        %845 = vmatpush1.msra.mxu0 0.0
        %846 = vmatprep.subr.mxu0 0.0
        %847 = vmatpush1.msra.mxu0 0.0
        %848 = vmatprep.subr.mxu0 0.0
        %849 = vmatpush1.msra.mxu0 0.0
        %850 = vmatprep.subr.mxu0 0.0
        %851 = vmatpush1.msra.mxu0 0.0
        %852 = vmatprep.subr.mxu0 0.0
        %853 = vmatpush1.msra.mxu0 0.0
        %854 = vmatprep.subr.mxu0 0.0
        %855 = vmatpush1.msra.mxu0 0.0
        %856 = vmatprep.subr.mxu0 0.0
        %857 = vmatpush1.msra.mxu0 0.0
        %858 = vmatprep.subr.mxu0 0.0
        %859 = vmatpush1.msra.mxu0 0.0
        %860 = vmatprep.subr.mxu0 0.0
        %861 = vmatpush1.msra.mxu0 0.0
        %862 = vmatprep.subr.mxu0 0.0
        %863 = vmatpush1.msra.mxu0 0.0
        %864 = vmatprep.subr.mxu0 0.0
        %865 = vmatpush1.msra.mxu0 0.0
        %866 = vmatprep.subr.mxu0 0.0
        %867 = vmatpush1.msra.mxu0 0.0
        %868 = vmatprep.subr.mxu0 0.0
        %869 = vmatpush1.msra.mxu0 0.0
        %870 = vmatprep.subr.mxu0 0.0
        %871 = vmatpush1.msra.mxu0 0.0
        %872 = vmatprep.subr.mxu0 0.0
        %873 = vmatpush1.msra.mxu0 0.0
        %874 = vmatprep.subr.mxu0 0.0
        %875 = vmatpush1.msra.mxu0 0.0
        %876 = vmatprep.subr.mxu0 0.0
        %877 = vmatpush1.msra.mxu0 0.0
        %878 = vmatprep.subr.mxu0 0.0
        %879 = vmatpush1.msra.mxu0 0.0
        %880 = vmatprep.subr.mxu0 0.0
        %881 = vmatpush1.msra.mxu0 0.0
        %882 = vmatprep.subr.mxu0 0.0
        %883 = vmatpush1.msra.mxu0 0.0
        %884 = vmatprep.subr.mxu0 0.0
        %885 = vmatpush1.msra.mxu0 0.0
        %886 = vmatprep.subr.mxu0 0.0
        %887 = vmatpush1.msra.mxu0 0.0
        %888 = vmatprep.subr.mxu0 0.0
        %889 = vmatpush1.msra.mxu0 0.0
        %890 = vmatprep.subr.mxu0 0.0
        %891 = vmatpush1.msra.mxu0 0.0
        %892 = vmatprep.subr.mxu0 0.0
        %893 = vmatpush1.msra.mxu0 0.0
        %894 = vmatprep.subr.mxu0 0.0
        %895 = vmatpush1.msra.mxu0 0.0
        %896 = vmatprep.subr.mxu0 0.0
        %897 = vmatpush1.msra.mxu0 0.0
        %898 = vmatprep.subr.mxu0 0.0
        %899 = vmatpush1.msra.mxu0 0.0
        %900 = vmatprep.subr.mxu0 0.0
        %901 = vmatpush1.msra.mxu0 0.0
        %902 = vmatprep.subr.mxu0 0.0
        %903 = vmatpush1.msra.mxu0 0.0
        %904 = vmatprep.mubr.f32.mxu0 0.0
        %905 = vmatmul.mubr.f32.gmra.mrb[0].mxu0 %v831
        %v906 = vpop.f32.mrb[0].mxu0
        %v907 = vadd.f32 0.0, %v906
        %v908 = vpop.f32.mrb[0].mxu0
        %v909 = vadd.f32 0.0, %v908
        %910 = vmatprep.mubr.f32.mxu0 0.0
        %911 = vmatmul.mubr.f32.gmra.mrb[0].mxu0 %v834
        %v912 = vpop.f32.mrb[0].mxu0
        %v913 = vadd.f32 0.0, %v912
        %v914 = vpop.f32.mrb[0].mxu0
        %v915 = vadd.f32 0.0, %v914
        %916 = vdwg.mxu0
        %v917 = vadd.f32 %v818, %v907
        %v918 = vadd.f32 %v820, %v909
        %v919 = vadd.f32 %v824, %v913
        %v920 = vadd.f32 %v826, %v915
        %922 = vset.pattern.permute.xlu0 0
        %923 = vperm.xlu0 %922, %v428
        %v924 = vpop.permute.xlu0 %923
        %927 = vset.pattern.permute.xlu0 0
        %928 = vperm.xlu0 %927, %v429
        %v929 = vpop.permute.xlu0 %928
        %v932 = vlaneseq
        %v933 = vshrl.u32 %v932, 7
        %v934 = vsub.s32 0, %v933
        %v935 = vrot.slane %v647, %v934
        %v936 = vlaneseq
        %v937 = vshrl.u32 %v936, 7
        %v938 = vsub.s32 1, %v937
        %v939 = vrot.slane %v647, %v938
        %v942 = vmul.f32 %v924, %v935
        %v943 = vmul.f32 %v924, %v939
        %v944 = vmul.f32 %v929, %v935
        %v945 = vmul.f32 %v929, %v939
        %v946 = vadd.f32 %v917, %v942
        %v947 = vadd.f32 %v918, %v943
        %v948 = vadd.f32 %v919, %v944
        %v949 = vadd.f32 %v920, %v945
        %950 = vset.pattern.permute.xlu0 1
        %951 = vperm.xlu0 %950, %v428
        %v952 = vpop.permute.xlu0 %951
        %954 = vset.pattern.permute.xlu0 1
        %955 = vperm.xlu0 %954, %v429
        %v956 = vpop.permute.xlu0 %955
        %v958 = vadd.f32 %v946, %v952
        %v959 = vadd.f32 %v947, %v952
        %v960 = vadd.f32 %v948, %v956
        %v961 = vadd.f32 %v949, %v956
        %vm962 = vcmp.gt.f32.partialorder %v958, 20.0
        %vm963 = vcmp.gt.f32.partialorder %v959, 20.0
        %vm964 = vcmp.gt.f32.partialorder %v960, 20.0
        %vm965 = vcmp.gt.f32.partialorder %v961, 20.0
        %v966 = vmul.f32 %v958, 1.442695
        %v967 = vpow.pop %v966
        %v968 = vmul.f32 %v959, 1.442695
        %v969 = vpow.pop %v968
        %v970 = vmul.f32 %v960, 1.442695
        %v971 = vpow.pop %v970
        %v972 = vmul.f32 %v961, 1.442695
        %v973 = vpow.pop %v972
        %v974 = vadd.f32 %v967, 1.0
        %v975 = vlog2.pop %v974
        %v976 = vmul.f32 %v975, 0.6931472
        %v977 = vmul.f32 -0.5, %v967
        %v978 = vadd.f32 %v977, 1.0
        %v979 = vmul.f32 %v978, %v967
        %v980 = vand.u32 2147483647, %v967
        %vm981 = vcmp.lt.f32.partialorder %v980, 0.0004427343
        %v982 = vsel %vm981, %v979, %v976
        %v983 = vadd.f32 %v969, 1.0
        %v984 = vlog2.pop %v983
        %v985 = vmul.f32 %v984, 0.6931472
        %v986 = vmul.f32 -0.5, %v969
        %v987 = vadd.f32 %v986, 1.0
        %v988 = vmul.f32 %v987, %v969
        %v989 = vand.u32 2147483647, %v969
        %vm990 = vcmp.lt.f32.partialorder %v989, 0.0004427343
        %v991 = vsel %vm990, %v988, %v985
        %v992 = vadd.f32 %v971, 1.0
        %v993 = vlog2.pop %v992
        %v994 = vmul.f32 %v993, 0.6931472
        %v995 = vmul.f32 -0.5, %v971
        %v996 = vadd.f32 %v995, 1.0
        %v997 = vmul.f32 %v996, %v971
        %v998 = vand.u32 2147483647, %v971
        %vm999 = vcmp.lt.f32.partialorder %v998, 0.0004427343
        %v1000 = vsel %vm999, %v997, %v994
        %v1001 = vadd.f32 %v973, 1.0
        %v1002 = vlog2.pop %v1001
        %v1003 = vmul.f32 %v1002, 0.6931472
        %v1004 = vmul.f32 -0.5, %v973
        %v1005 = vadd.f32 %v1004, 1.0
        %v1006 = vmul.f32 %v1005, %v973
        %v1007 = vand.u32 2147483647, %v973
        %vm1008 = vcmp.lt.f32.partialorder %v1007, 0.0004427343
        %v1009 = vsel %vm1008, %v1006, %v1003
        %v1010 = vsel %vm962, %v958, %v982
        %v1011 = vsel %vm963, %v959, %v991
        %v1012 = vsel %vm964, %v960, %v1000
        %v1013 = vsel %vm965, %v961, %v1009
        %vm1014 = vcmask 105472
        %v1016 = vsel %vm1014, %v430, 0
        %vm1018 = vcmask 1044480
        %v1020 = vsel %vm1018, %v1012, 0
        %v1023 = vsel %vm1018, %v1013, 0
        %1025 = vmatprep.subr.mxu0 %v1011
        %1026 = vmatpush1.msra.mxu0 %v1010
        %1027 = vmatprep.subr.mxu0 %v1023
        %1028 = vmatpush1.msra.mxu0 %v1020
        %1029 = vmatprep.subr.mxu0 0.0
        %1030 = vmatpush1.msra.mxu0 0.0
        %1031 = vmatprep.subr.mxu0 0.0
        %1032 = vmatpush1.msra.mxu0 0.0
        %1033 = vmatprep.subr.mxu0 0.0
        %1034 = vmatpush1.msra.mxu0 0.0
        %1035 = vmatprep.subr.mxu0 0.0
        %1036 = vmatpush1.msra.mxu0 0.0
        %1037 = vmatprep.subr.mxu0 0.0
        %1038 = vmatpush1.msra.mxu0 0.0
        %1039 = vmatprep.subr.mxu0 0.0
        %1040 = vmatpush1.msra.mxu0 0.0
        %1041 = vmatprep.subr.mxu0 0.0
        %1042 = vmatpush1.msra.mxu0 0.0
        %1043 = vmatprep.subr.mxu0 0.0
        %1044 = vmatpush1.msra.mxu0 0.0
        %1045 = vmatprep.subr.mxu0 0.0
        %1046 = vmatpush1.msra.mxu0 0.0
        %1047 = vmatprep.subr.mxu0 0.0
        %1048 = vmatpush1.msra.mxu0 0.0
        %1049 = vmatprep.subr.mxu0 0.0
        %1050 = vmatpush1.msra.mxu0 0.0
        %1051 = vmatprep.subr.mxu0 0.0
        %1052 = vmatpush1.msra.mxu0 0.0
        %1053 = vmatprep.subr.mxu0 0.0
        %1054 = vmatpush1.msra.mxu0 0.0
        %1055 = vmatprep.subr.mxu0 0.0
        %1056 = vmatpush1.msra.mxu0 0.0
        %1057 = vmatprep.subr.mxu0 0.0
        %1058 = vmatpush1.msra.mxu0 0.0
        %1059 = vmatprep.subr.mxu0 0.0
        %1060 = vmatpush1.msra.mxu0 0.0
        %1061 = vmatprep.subr.mxu0 0.0
        %1062 = vmatpush1.msra.mxu0 0.0
        %1063 = vmatprep.subr.mxu0 0.0
        %1064 = vmatpush1.msra.mxu0 0.0
        %1065 = vmatprep.subr.mxu0 0.0
        %1066 = vmatpush1.msra.mxu0 0.0
        %1067 = vmatprep.subr.mxu0 0.0
        %1068 = vmatpush1.msra.mxu0 0.0
        %1069 = vmatprep.subr.mxu0 0.0
        %1070 = vmatpush1.msra.mxu0 0.0
        %1071 = vmatprep.subr.mxu0 0.0
        %1072 = vmatpush1.msra.mxu0 0.0
        %1073 = vmatprep.subr.mxu0 0.0
        %1074 = vmatpush1.msra.mxu0 0.0
        %1075 = vmatprep.subr.mxu0 0.0
        %1076 = vmatpush1.msra.mxu0 0.0
        %1077 = vmatprep.subr.mxu0 0.0
        %1078 = vmatpush1.msra.mxu0 0.0
        %1079 = vmatprep.subr.mxu0 0.0
        %1080 = vmatpush1.msra.mxu0 0.0
        %1081 = vmatprep.subr.mxu0 0.0
        %1082 = vmatpush1.msra.mxu0 0.0
        %1083 = vmatprep.subr.mxu0 0.0
        %1084 = vmatpush1.msra.mxu0 0.0
        %1085 = vmatprep.subr.mxu0 0.0
        %1086 = vmatpush1.msra.mxu0 0.0
        %1087 = vmatprep.subr.mxu0 0.0
        %1088 = vmatpush1.msra.mxu0 0.0
        %1089 = vmatprep.mubr.f32.mxu0 0.0
        %1090 = vmatmul.mubr.f32.gmra.mrb[0].mxu0 %v1016
        %v1091 = vpop.f32.mrb[0].mxu0
        %v1092 = vadd.f32 0.0, %v1091
        %v1093 = vpop.f32.mrb[0].mxu0
        %v1094 = vadd.f32 0.0, %v1093
        %1095 = vdwg.mxu0
        %v1098 = vcombine.low %v1092, %v1094
        %v1100 = vunpack.c.l.s4 1966171168
        %v1101 = vunpack.c.0.s8 %v1100
        %v1102 = vlaneseq
        %v1103 = vshrl.u32 %v1102, 7
        %v1104 = vsub.s32 %v1101, %v1103
        %v1105 = vrot.slane %v1098, %v1104
        %v1107 = vunpack.c.l.s4 1966171168
        %v1108 = vunpack.c.0.s8 %v1107
        %v1109 = vlaneseq
        %v1110 = vshrl.u32 %v1109, 7
        %v1111 = vsub.s32 %v1108, %v1110
        %v1112 = vrot.slane %v1105, %v1111
        %v1114 = vlaneseq
        %vm1115 = vcmp.ge.s32.totalorder %v1114, 0
        %vm1116 = vcmp.lt.s32.totalorder %v1114, 256
        %vm1117 = vmand %vm1115, %vm1116
        %1118 = vst.msk [vmem:[%s384] sm:$0x3] %vm1117, %v1112
        %s1119 = sand.u32 %s216, 1
        %s1120 = scalar_lea.sflag [#allocation4], %s1119
        %s1121 = sand.u32 %s216, 1
        %s1122 = smul.addr %s1121, 2
        %s1123 = scalar_lea.vmem [#allocation5], %s1122
        // Predicated region
        $region57: #{tpu_custom_call.1} parent=51 // pred_check
          %p1124 = pneg %p226
        $region58: #{tpu_custom_call.1} parent=51 // pred_check_branch
          %1126 = sbr.rel (%p1124) target = $region60
        $region59: #{tpu_custom_call.1} parent=51 // pred_region
          %s1127 = smul.u32 2, %s25
          %s1128 = ssub.s32 3, %s1127
          %p1129 = scmp.lt.s32.totalorder %s1128, 2
          %s1130 = scalar_select %p1129, %s1128, 2
          %s1131 = smul.u32 16, %s1130
          %s1133 = ssub.s32 32, %s1131
          %1134 = vsyncadd %s1120, %s1133
          %p1135 = scmp.ne.s32.totalorder 0, %s1131
          %s1136 = smul.addr %s1127, 16
          %s1137 = scalar_lea.hbm %s8, %s1136
          %s1138 = sshll.u32 %s1130, 4
          %s1139 = sshll.u32 %s1123, 4
          %s1140 = int_to_ptr.vmem [resolvable:$true] %s1139
          %1142 = dma.vmem_to_hbm [thread:$0]  (%p1135), %s1140, %s1138, %s1137, %s1120
        $region60: #{tpu_custom_call.1} parent=51 // pred_fallthru
          _
      $region52: #{tpu_custom_call.1} parent=5 // pred_fallthru
        _
      %p1143 = scmp.le.s32.totalorder 2, %s20
      // Predicated region
      $region61: #{tpu_custom_call.1} parent=5 // pred_check
        %p1144 = pneg %p1143
      $region62: #{tpu_custom_call.1} parent=5 // pred_check_branch
        %1146 = sbr.rel (%p1144) target = $region64
      $region63: #{tpu_custom_call.1} parent=5 // pred_region
        %s1147 = ssub.s32 %s20, 2
        // Predicated region
        $region65: #{tpu_custom_call.1} parent=63 // pred_check
          %p1148 = pneg %p232
        $region66: #{tpu_custom_call.1} parent=63 // pred_check_branch
          %1150 = sbr.rel (%p1148) target = $region68
        $region67: #{tpu_custom_call.1} parent=63 // pred_region
          %s1151 = sand.u32 %s217, 1
          %s1152 = scalar_lea.sflag [#allocation4], %s1151
          %s1153 = sand.u32 %s217, 1
          %s1154 = smul.addr %s1153, 2
          %s1155 = scalar_lea.vmem [#allocation5], %s1154
          %1156 = dma.done %s1152, 32
        $region68: #{tpu_custom_call.1} parent=63 // pred_fallthru
          _
      $region64: #{tpu_custom_call.1} parent=5 // pred_fallthru
        _
    $region6: #{tpu_custom_call.1} parent=1 // loop_footer
      %s24 = sadd.s32 1, %s20
    $region7: #{tpu_custom_call.1} parent=1 // loop_footer_branch
      %19 = sbr.rel target = $region3
    $region8: #{tpu_custom_call.1} parent=1 // loop_exit
      _
    %1157 = vsyncpa [#allocation3], 1
    %s1158 = scalar_lea.sflag [#allocation3], 1
    %1159 = vsyncpa %s1158, 1
    %1160 = vsyncpa [#allocation4], 1
    %s1161 = scalar_lea.sflag [#allocation4], 1
    %1162 = vsyncpa %s1161, 1

</llo_original>
